<compile_context>
chip_gen: v5e
topology: v5e:2x2
jax: 0.10.0
libtpu: 0.0.40
codegen_flags: <defaults>
</compile_context>

<pallas_src>
import functools
import math

import jax
import jax.numpy as jnp
import numpy as np
from jax.experimental import pallas as pl
from jax.experimental.pallas import tpu as pltpu


_LANES = 128
# Per-input block byte budget.  ~2 MiB keeps 2 inputs x 2 buffers = 8 MiB,
# which fits v5e's 16 MiB scoped-VMEM default and is already in the measured
# 85%+-of-roofline regime on v6e; v7x would prefer ~4 MiB but 2 MiB stays well
# under its 32-of-64 MiB scoped default without touching vmem_limit_bytes.
_BLOCK_BYTES = 2 << 20


def _sq_err_partial_kernel(x_ref, t_ref, out_ref, *, block_rows, total_rows,
                           need_mask):
    # x_ref / t_ref: (block_rows, 128) tile; out_ref: (1, 128) lane partials.
    x = x_ref[...].astype(jnp.float32)
    t = t_ref[...].astype(jnp.float32)
    d = x - t
    sq = d * d
    if need_mask:
        # Last grid step may read past the end of the (rows, 128) slab; zero
        # the padded rows before reducing.
        row0 = pl.program_id(0) * block_rows
        rid = row0 + jax.lax.broadcasted_iota(jnp.int32, sq.shape, 0)
        sq = jnp.where(rid < total_rows, sq, 0.0)
    # Reduce only over the sublane axis; the tiny (G, 128) cross-lane reduction
    # happens once in the wrapper.
    out_ref[...] = jnp.sum(sq, axis=0, keepdims=True)


def _pick_block_rows(rows, itemsize):
    """Rows of 128 lanes per block, sized by a dtype-aware byte budget."""
    itemsize = int(itemsize)
    # Native sublane tile: (8,128) f32, (16,128) bf16, (32,128) int8.
    sub = 8 * max(1, 4 // itemsize)
    budget_rows = max(sub, (_BLOCK_BYTES // (_LANES * itemsize)) // sub * sub)
    if rows <= budget_rows:
        # Whole slab fits in one block.  If it is big enough to matter, split
        # it in two so v7x's second TensorCore is not idle.
        if rows >= 2 * sub and rows * _LANES * itemsize > (512 << 10):
            half = -(-rows // 2)
            return -(-half // sub) * sub
        return rows  # block dim == full array dim is always a legal block
    return budget_rows


def _sum_squared_diff(x, target, *, block_rows=None):
    """Total sum of (x - target)**2 over all elements (f32 accumulation)."""
    assert x.shape == target.shape, (x.shape, target.shape)
    n = math.prod(x.shape)
    itemsize = np.dtype(x.dtype).itemsize

    xf = jnp.reshape(x, (-1,))
    tf = jnp.reshape(target, (-1,))
    rows = n // _LANES
    tail = n - rows * _LANES
    total = jnp.zeros((), jnp.float32)

    if rows > 0:
        if tail == 0:
            # Copy-free reshape of the contiguous array.
            xm = jnp.reshape(xf, (rows, _LANES))
            tm = jnp.reshape(tf, (rows, _LANES))
        else:
            # Ragged total size: the slice materializes a copy of the main
            # part, but only for sizes not divisible by 128 (rare fallback).
            main = rows * _LANES
            xm = jnp.reshape(xf[:main], (rows, _LANES))
            tm = jnp.reshape(tf[:main], (rows, _LANES))

        tr = int(block_rows) if block_rows is not None else _pick_block_rows(
            rows, itemsize)
        grid = pl.cdiv(rows, tr)
        need_mask = (rows % tr) != 0

        kernel = functools.partial(
            _sq_err_partial_kernel,
            block_rows=tr, total_rows=rows, need_mask=need_mask)

        partial = pl.pallas_call(
            kernel,
            out_shape=jax.ShapeDtypeStruct((grid, _LANES), jnp.float32),
            grid=(grid,),
            in_specs=[
                pl.BlockSpec((tr, _LANES), lambda i: (i, 0)),
                pl.BlockSpec((tr, _LANES), lambda i: (i, 0)),
            ],
            out_specs=pl.BlockSpec((1, _LANES), lambda i: (i, 0)),
            compiler_params=pltpu.CompilerParams(
                # Independent per-step output blocks -> the row-tile axis can
                # be sharded across TensorCores (2x on v7x).
                dimension_semantics=("parallel",),
            ),
        )(xm, tm)
        total = total + jnp.sum(partial, dtype=jnp.float32)

    if tail > 0:
        # <128-element tail: one-line XLA sum, negligible.
        dx = (xf[rows * _LANES:].astype(jnp.float32)
              - tf[rows * _LANES:].astype(jnp.float32))
        total = total + jnp.sum(dx * dx)

    return total


def clip_mse(x, target, mask=None, query_labels=None, *, block_rows=None):
    """Forward pass of the PyTorch `clip_mse` module.

    `mask` / `query_labels` are accepted only for signature parity; the
    reference forward never reads them.
    """
    if x.ndim == 3:
        # sum over dim=1 -> [B, C]; mean -> divide by B*C.
        divisor = int(x.shape[0]) * int(x.shape[2])
    else:
        # sum over dim=-1 -> x.shape[:-1]; mean -> divide by prod(shape[:-1]).
        divisor = math.prod(int(s) for s in x.shape[:-1])
        divisor = max(divisor, 1)

    total = _sum_squared_diff(x, target, block_rows=block_rows)
    # Single wrapper-side scalar multiply by the static reciprocal.
    return total * jnp.float32(1.0 / divisor)


def _reference(x, target):
    xd = np.asarray(jax.device_get(x)).astype(np.float64)
    td = np.asarray(jax.device_get(target)).astype(np.float64)
    d = (xd - td) ** 2
    s = d.sum(axis=1) if d.ndim == 3 else d.sum(axis=-1)
    return np.float32(s.mean())


if __name__ == "__main__":
    key = jax.random.PRNGKey(0)
    k1, k2, k3, k4, k5, k6 = jax.random.split(key, 6)

    # Case 1: 3D input [B, N, C] (sum over dim=1), numel % 128 == 0, single
    # dense Pallas block.  mask / query_labels passed but unused.
    B, N, C = 2, 16, 16
    x1 = jax.random.normal(k1, (B, N, C), dtype=jnp.float32)
    t1 = jax.random.normal(k2, (B, N, C), dtype=jnp.float32)
    mask = (jax.random.uniform(k3, (C, N)) > 0.5).astype(jnp.float32)
    query_labels = jnp.zeros((B,), dtype=jnp.int32)
    loss1 = jax.block_until_ready(clip_mse(x1, t1, mask, query_labels))
    np.testing.assert_allclose(np.asarray(loss1), _reference(x1, t1),
                               rtol=1e-5, atol=1e-5)

    # Case 2: multi-step grid with a ragged last row-block (exercises the
    # in-kernel iota mask path) via an explicit block_rows override.
    x2 = jax.random.normal(k4, (2, 10, 128), dtype=jnp.float32)
    t2 = jax.random.normal(k5, (2, 10, 128), dtype=jnp.float32)
    loss2 = jax.block_until_ready(clip_mse(x2, t2, None, None, block_rows=8))
    np.testing.assert_allclose(np.asarray(loss2), _reference(x2, t2),
                               rtol=1e-5, atol=1e-5)

    # Case 3: 2D input (sum over dim=-1 branch) with numel % 128 != 0
    # (exercises the wrapper-side tail handling).
    x3 = jax.random.normal(k6, (4, 40), dtype=jnp.float32)
    t3 = x3 * 0.5
    loss3 = jax.block_until_ready(clip_mse(x3, t3, None, None))
    np.testing.assert_allclose(np.asarray(loss3), _reference(x3, t3),
                               rtol=1e-5, atol=1e-5)

    # Case 4: bf16 inputs (half the HBM traffic); kernel upcasts to f32.
    x4 = x1.astype(jnp.bfloat16)
    t4 = t1.astype(jnp.bfloat16)
    loss4 = jax.block_until_ready(clip_mse(x4, t4, None, None))
    np.testing.assert_allclose(
        np.asarray(loss4),
        _reference(x4.astype(jnp.float32), t4.astype(jnp.float32)),
        rtol=1e-5, atol=1e-5)

    print("KERNEL_OK")
</pallas_src>

<mosaic_0001>
module attributes {stable_mosaic.version = 11 : i64} {
  func.func @_sq_err_partial_kernel(%arg0: i32, %arg1: memref<4x128xf32, #tpu.memory_space<vmem>>, %arg2: memref<4x128xf32, #tpu.memory_space<vmem>>, %arg3: memref<1x128xf32, #tpu.memory_space<vmem>>) attributes {dimension_semantics = [#tpu.dimension_semantics<parallel>], iteration_bounds = array<i64: 1>, scalar_prefetch = 0 : i64, scratch_operands = 0 : i64, tpu.core_type = #tpu.core_type<tc>, window_params = [{transform_indices = @transform_0, window_bounds = array<i64: 4, 128>}, {transform_indices = @transform_1, window_bounds = array<i64: 4, 128>}, {transform_indices = @transform_2, window_bounds = array<i64: 1, 128>}]} {
    %c0 = arith.constant 0 : index
    %c0_0 = arith.constant 0 : index
    %0 = vector.load %arg1[%c0, %c0_0] : memref<4x128xf32, #tpu.memory_space<vmem>>, vector<4x128xf32>
    %c0_1 = arith.constant 0 : index
    %c0_2 = arith.constant 0 : index
    %1 = vector.load %arg2[%c0_1, %c0_2] : memref<4x128xf32, #tpu.memory_space<vmem>>, vector<4x128xf32>
    %2 = arith.subf %0, %1 : vector<4x128xf32>
    %3 = arith.mulf %2, %2 : vector<4x128xf32>
    %cst = arith.constant dense<0.000000e+00> : vector<128xf32>
    %4 = vector.multi_reduction <add>, %3, %cst [0] : vector<4x128xf32> to vector<128xf32>
    %5 = vector.shape_cast %4 : vector<128xf32> to vector<1x128xf32>
    %c0_3 = arith.constant 0 : index
    %c0_4 = arith.constant 0 : index
    %6 = vector.load %arg3[%c0_3, %c0_4] : memref<1x128xf32, #tpu.memory_space<vmem>>, vector<1x128xf32>
    tpu.vector_store %arg3[%c0_3, %c0_4], %5 {strides = array<i32>} : memref<1x128xf32, #tpu.memory_space<vmem>>, vector<1x128xf32>,
    return
  }
  func.func @transform_0(%arg0: i32) -> (i32, i32) {
    %c0_i32 = arith.constant 0 : i32
    %c0_i32_0 = arith.constant 0 : i32
    return %arg0, %c0_i32 : i32, i32
  }
  func.func @transform_1(%arg0: i32) -> (i32, i32) {
    %c0_i32 = arith.constant 0 : i32
    %c0_i32_0 = arith.constant 0 : i32
    return %arg0, %c0_i32 : i32, i32
  }
  func.func @transform_2(%arg0: i32) -> (i32, i32) {
    %c0_i32 = arith.constant 0 : i32
    %c0_i32_0 = arith.constant 0 : i32
    return %arg0, %c0_i32 : i32, i32
  }
}

</mosaic_0001>

<llo_original>
// kernel: tpu_custom_call.1
$region0: #{tpu_custom_call.1}
  #allocation0 [shape = 'u32[]', space=smem, size = 0x4, offset = 0x4, fixed_abs, tag = 'smem constant byte address 0x4 - core index']
  #allocation1 [shape = 'u32[72,128]{1,0:T(1,128)}', space=vmem, size = 0x9000, scoped, tag = 'internal scratch']
  %s0 = inlined_call_operand.hbm [shape: f32[4,128], index: 0, kind: input, shape index: {}]
  %s1 = inlined_call_operand.hbm [shape: f32[4,128], index: 1, kind: input, shape index: {}]
  %s2 = inlined_call_operand.hbm [shape: f32[1,128], index: 2, kind: output, shape index: {}]
  %s3 = sld [smem:[#allocation0]]
  $region26: #{tpu_custom_call.1} parent=0
    _
  %s5 = ssub.s32 1, %s3
  %s6 = scalar_select 0, %s5, %s3
  $region1: #{tpu_custom_call.1} parent=0
    #allocation2 [shape = 'u8[2048]{0}', space=vmem, size = 0x800, scoped, tag = 'input window, operand 0, single buffered']
    #allocation3 [shape = 's32[1]{0}', space=sflag, size = 0x4, scoped, tag = 'scoped memory for tpu_custom_call.1']
    #allocation4 [shape = 's32[1]{0}', space=sflag, size = 0x4, scoped, tag = 'scoped memory for tpu_custom_call.1']
    #allocation5 [shape = 'u8[2048]{0}', space=vmem, size = 0x800, scoped, tag = 'input window, operand 1, single buffered']
    #allocation6 [shape = 's32[1]{0}', space=sflag, size = 0x4, scoped, tag = 'scoped memory for tpu_custom_call.1']
    #allocation7 [shape = 'u8[512]{0}', space=vmem, size = 0x400, scoped, tag = 'output window, operand 0, single buffered']
    %7 = vsyncpa [#allocation3], 0
    %8 = vsyncpa [#allocation6], 0
    %9 = vsyncpa [#allocation4], 0
    // Predicated region
    $region2: #{tpu_custom_call.1} parent=1 // pred_check
      _
    $region3: #{tpu_custom_call.1} parent=1 // pred_check_branch
      %11 = sbr.rel (0) target = $region5
    $region4: #{tpu_custom_call.1} parent=1 // pred_region
      %13 = vsyncadd [#allocation3], 0
      %s15 = sshll.u32 %s0, 4
      %s16 = int_to_ptr.hbm [resolvable:$true] %s15
      %s17 = sshll.u32 [#allocation2], 4
      %s18 = int_to_ptr.vmem [resolvable:$true] %s17
      %20 = dma.hbm_to_vmem [thread:$0]  %s16, 64, %s18, [#allocation3]
    $region5: #{tpu_custom_call.1} parent=1 // pred_fallthru
      _
    // Predicated region
    $region6: #{tpu_custom_call.1} parent=1 // pred_check
      _
    $region7: #{tpu_custom_call.1} parent=1 // pred_check_branch
      %22 = sbr.rel (0) target = $region9
    $region8: #{tpu_custom_call.1} parent=1 // pred_region
      %24 = vsyncadd [#allocation6], 0
      %s26 = sshll.u32 %s1, 4
      %s27 = int_to_ptr.hbm [resolvable:$true] %s26
      %s28 = sshll.u32 [#allocation5], 4
      %s29 = int_to_ptr.vmem [resolvable:$true] %s28
      %31 = dma.hbm_to_vmem [thread:$0]  %s27, 64, %s29, [#allocation6]
    $region9: #{tpu_custom_call.1} parent=1 // pred_fallthru
      _
    // Predicated region
    $region10: #{tpu_custom_call.1} parent=1 // pred_check
      _
    $region11: #{tpu_custom_call.1} parent=1 // pred_check_branch
      %33 = sbr.rel (0) target = $region13
    $region12: #{tpu_custom_call.1} parent=1 // pred_region
      %35 = dma.done [#allocation3], 64
    $region13: #{tpu_custom_call.1} parent=1 // pred_fallthru
      _
    // Predicated region
    $region14: #{tpu_custom_call.1} parent=1 // pred_check
      _
    $region15: #{tpu_custom_call.1} parent=1 // pred_check_branch
      %37 = sbr.rel (0) target = $region17
    $region16: #{tpu_custom_call.1} parent=1 // pred_region
      %39 = dma.done [#allocation6], 64
    $region17: #{tpu_custom_call.1} parent=1 // pred_fallthru
      _
    %v40 = vld [vmem:[#allocation2] sm:$0xf]
    %v41 = vld [vmem:[#allocation5] sm:$0xf]
    %v42 = vsub.f32 %v40, %v41
    %v43 = vmul.f32 %v42, %v42
    %vm44 = vcmask 1043456
    %v45 = vsel %vm44, %v43, 0.0
    %v46 = vrot.slane %v45, 4
    %v47 = vadd.f32 %v45, %v46
    %v48 = vrot.slane %v47, 2
    %v49 = vadd.f32 %v47, %v48
    %v50 = vrot.slane %v49, 1
    %v51 = vadd.f32 %v49, %v50
    %52 = vst [vmem:[#allocation7] sm:$0x1] %v51
    // Predicated region
    $region18: #{tpu_custom_call.1} parent=1 // pred_check
      _
    $region19: #{tpu_custom_call.1} parent=1 // pred_check_branch
      %54 = sbr.rel (0) target = $region21
    $region20: #{tpu_custom_call.1} parent=1 // pred_region
      %56 = vsyncadd [#allocation4], 0
      %s58 = sshll.u32 [#allocation7], 4
      %s59 = int_to_ptr.vmem [resolvable:$true] %s58
      %s60 = sshll.u32 %s2, 4
      %s61 = int_to_ptr.hbm [resolvable:$true] %s60
      %63 = dma.vmem_to_hbm [thread:$0]  %s59, 16, %s61, [#allocation4]
    $region21: #{tpu_custom_call.1} parent=1 // pred_fallthru
      _
    // Predicated region
    $region22: #{tpu_custom_call.1} parent=1 // pred_check
      _
    $region23: #{tpu_custom_call.1} parent=1 // pred_check_branch
      %65 = sbr.rel (0) target = $region25
    $region24: #{tpu_custom_call.1} parent=1 // pred_region
      %67 = dma.done [#allocation4], 16
    $region25: #{tpu_custom_call.1} parent=1 // pred_fallthru
      _
    %68 = vsyncpa [#allocation3], 1
    %69 = vsyncpa [#allocation6], 1
    %70 = vsyncpa [#allocation4], 1

</llo_original>
